<compile_context>
chip_gen: v6e
topology: v6e:2x2x1
jax: 0.10.0
libtpu: 0.0.40
codegen_flags: <defaults>
</compile_context>

<pallas_src>
from functools import lru_cache

import numpy as np
import jax
import jax.numpy as jnp
from jax.experimental import pallas as pl
from jax.experimental.pallas import tpu as pltpu


# ---------------------------------------------------------------------------
# Static (shape-only) linear operators: adaptive avg-pool and bilinear upsample.
# ---------------------------------------------------------------------------
def _adaptive_avg_pool_matrix(in_size, out_size):
    """P[i, h] such that pooled[i] = sum_h P[i,h] * x[h]  (PyTorch AdaptiveAvgPool)."""
    P = np.zeros((out_size, in_size), dtype=np.float32)
    for i in range(out_size):
        start = (i * in_size) // out_size
        end = -(-((i + 1) * in_size) // out_size)  # ceil
        P[i, start:end] = 1.0 / (end - start)
    return P


def _bilinear_upsample_matrix(out_size, in_size):
    """A[h, i] such that up[h] = sum_i A[h,i] * z[i]  (bilinear, align_corners=True)."""
    A = np.zeros((out_size, in_size), dtype=np.float32)
    if in_size == 1:
        A[:, 0] = 1.0
        return A
    for h in range(out_size):
        src = h * (in_size - 1) / (out_size - 1)
        i0 = min(int(np.floor(src)), in_size - 2)
        w1 = src - i0
        A[h, i0] += 1.0 - w1
        A[h, i0 + 1] += w1
    return A


def _round_up(v, m):
    return -(-v // m) * m


@lru_cache(maxsize=None)
def _pooling_upsample_operators(H, W, bins, hw_pad):
    """Fused pooling operator pT [hw_pad, B2] and stacked upsample operator
    mT [nb, B2, hw_pad] (bf16).  Bin b occupies columns/rows
    offs[b] : offs[b]+b*b of the fused B2 dimension; everything else is zero."""
    nb = len(bins)
    HW = H * W
    sizes = [b * b for b in bins]
    offs = np.cumsum([0] + sizes[:-1])
    B2 = _round_up(sum(sizes), 128)
    pT = np.zeros((hw_pad, B2), np.float32)
    mT = np.zeros((nb, B2, hw_pad), np.float32)
    for i, b in enumerate(bins):
        P = np.kron(_adaptive_avg_pool_matrix(H, b), _adaptive_avg_pool_matrix(W, b))  # [b*b, HW]
        M = np.kron(_bilinear_upsample_matrix(H, b), _bilinear_upsample_matrix(W, b))  # [HW, b*b]
        o = int(offs[i])
        pT[:HW, o:o + sizes[i]] = P.T
        mT[i, o:o + sizes[i], :HW] = M.T
    return jnp.asarray(pT, jnp.bfloat16), jnp.asarray(mT, jnp.bfloat16)


# ---------------------------------------------------------------------------
# Kernel 1: HW-tiled fused adaptive avg-pool (reduction) + 1x1 conv + BN + ReLU.
# ---------------------------------------------------------------------------
def _make_pool_conv_kernel(bins):
    sizes = tuple(b * b for b in bins)
    offs = tuple(int(o) for o in np.cumsum((0,) + sizes[:-1]))
    nb = len(bins)

    def kernel(x_ref, pT_ref, wT_ref, shift_ref, z_ref, acc_ref):
        # x_ref:(1,Cin,hwt) bf16  pT_ref:(hwt,B2) bf16  wT_ref:(nb,Cr,Cin) bf16
        # shift_ref:(nb,Cr,1) f32  z_ref:(1,nb,Cr,B2) f32  acc_ref:(Cin,B2) f32
        k = pl.program_id(1)

        @pl.when(k == 0)
        def _():
            acc_ref[...] = jnp.zeros_like(acc_ref)

        # Fused adaptive average pool over ALL bins: one MXU matmul per HW tile.
        acc_ref[...] += jnp.dot(x_ref[0], pT_ref[...],
                                preferred_element_type=jnp.float32)

        @pl.when(k == pl.num_programs(1) - 1)
        def _():
            pooled = acc_ref[...].astype(jnp.bfloat16)             # [Cin, B2]
            for b in range(nb):                                    # static unroll
                off, bb = offs[b], sizes[b]
                # 1x1 conv (BN scale folded into wT) + BN shift + ReLU (f32 VPU).
                y = jnp.dot(wT_ref[b], pooled,
                            preferred_element_type=jnp.float32)    # [Cr, B2]
                zb = jnp.maximum(y + shift_ref[b], 0.0)
                # Explicitly zero everything outside this bin's valid b*b columns.
                col = jax.lax.broadcasted_iota(jnp.int32, zb.shape, 1)
                zb = jnp.where((col >= off) & (col < off + bb), zb, 0.0)
                z_ref[0, b] = zb

    return kernel


# ---------------------------------------------------------------------------
# Kernel 2: bilinear upsample of every bin + identity channel concat, per HW tile.
# ---------------------------------------------------------------------------
def _ppm_upsample_kernel(x_ref, z_ref, mT_ref, o_ref):
    # x_ref:(1,Cin,hwt) f32  z_ref:(1,nb,Cr,B2) f32  mT_ref:(nb,B2,hwt) bf16
    # o_ref:(1,Cin+nb*Cr,hwt) f32
    cin = x_ref.shape[1]
    nb, cr = z_ref.shape[1], z_ref.shape[2]
    # Identity branch of the channel concat: VMEM->VMEM DMA (off the vst slot).
    pltpu.sync_copy(x_ref, o_ref.at[:, :cin, :])
    for b in range(nb):                                            # static unroll
        zb = z_ref[0, b].astype(jnp.bfloat16)                      # [Cr, B2]
        # Bilinear (align_corners=True) upsample as matmul; z's padding columns
        # are explicitly zero and mT's padding rows are zero, so this is exact.
        up = jnp.dot(zb, mT_ref[b], preferred_element_type=jnp.float32)  # [Cr, hwt]
        o_ref[0, cin + b * cr: cin + (b + 1) * cr, :] = up


# ---------------------------------------------------------------------------
# PPM forward (wrapper).  x is NCHW like the PyTorch module; output is NCHW.
# ---------------------------------------------------------------------------
def ppm_forward(x_nchw, params, bins):
    bins = tuple(int(b) for b in bins)
    N, Cin, H, W = x_nchw.shape
    nb = len(bins)
    Cr = params[0]["w"].shape[1]
    Ctot = Cin + nb * Cr
    HW = H * W
    B2 = _round_up(sum(b * b for b in bins), 128)

    # Lane (HW) padding: multiple of 128 and of the HW tile -> unmasked stores.
    HW_pad = _round_up(HW, 128)
    hw_tile = HW_pad
    for cand in (512, 256, 128):          # production target ~512-wide tiles
        if HW_pad % cand == 0:
            hw_tile = cand
            break
    n_hw = HW_pad // hw_tile

    x_flat = x_nchw.reshape(N, Cin, HW)            # pure reshape, no transpose
    if HW_pad != HW:
        x_flat = jnp.pad(x_flat, ((0, 0), (0, 0), (0, HW_pad - HW)))
    x_bf16 = x_flat.astype(jnp.bfloat16)           # MXU operand for the pooling

    pT, mT = _pooling_upsample_operators(H, W, bins, HW_pad)   # cached constants

    # Fold eval-mode BN scale into the 1x1 conv weight; keep the shift as a bias.
    wT = jnp.stack([(p["w"] * p["scale"][None, :]).T for p in params]).astype(jnp.bfloat16)
    shift = jnp.stack([p["shift"][:, None] for p in params]).astype(jnp.float32)   # [nb,Cr,1]

    vmem_limit = 64 * 1024 * 1024

    # --- Kernel 1: fused all-bin pooling (HW reduction) + folded conv/BN/ReLU. ---
    z = pl.pallas_call(
        _make_pool_conv_kernel(bins),
        out_shape=jax.ShapeDtypeStruct((N, nb, Cr, B2), jnp.float32),
        grid=(N, n_hw),
        in_specs=[
            pl.BlockSpec((1, Cin, hw_tile), lambda n, k: (n, 0, k)),
            pl.BlockSpec((hw_tile, B2), lambda n, k: (k, 0)),
            pl.BlockSpec((nb, Cr, Cin), lambda n, k: (0, 0, 0),
                         pipeline_mode=pl.Buffered(1)),           # single-buffer const
            pl.BlockSpec((nb, Cr, 1), lambda n, k: (0, 0, 0),
                         pipeline_mode=pl.Buffered(1)),           # single-buffer const
        ],
        out_specs=pl.BlockSpec((1, nb, Cr, B2), lambda n, k: (n, 0, 0, 0)),
        scratch_shapes=[pltpu.VMEM((Cin, B2), jnp.float32)],       # pooled accumulator
        compiler_params=pltpu.CompilerParams(
            dimension_semantics=("parallel", "arbitrary"),
            vmem_limit_bytes=vmem_limit),
    )(x_bf16, pT, wT, shift)

    # --- Kernel 2: per-HW-tile bilinear upsample of all bins + identity concat. ---
    out_flat = pl.pallas_call(
        _ppm_upsample_kernel,
        out_shape=jax.ShapeDtypeStruct((N, Ctot, HW_pad), jnp.float32),
        grid=(N, n_hw),
        in_specs=[
            pl.BlockSpec((1, Cin, hw_tile), lambda n, k: (n, 0, k)),
            pl.BlockSpec((1, nb, Cr, B2), lambda n, k: (n, 0, 0, 0)),
            pl.BlockSpec((nb, B2, hw_tile), lambda n, k: (0, 0, k)),
        ],
        out_specs=pl.BlockSpec((1, Ctot, hw_tile), lambda n, k: (n, 0, k)),
        compiler_params=pltpu.CompilerParams(
            dimension_semantics=("parallel", "parallel"),
            vmem_limit_bytes=vmem_limit),
    )(x_flat, z, mT)

    return out_flat[:, :, :HW].reshape(N, Ctot, H, W)


# Pure-JAX reference (same math, no Pallas, f32) used to verify the kernels.
def ppm_reference(x_nchw, params, bins):
    N, Cin, H, W = x_nchw.shape
    outs = [x_nchw]
    for b, p in zip(bins, params):
        Ph = jnp.asarray(_adaptive_avg_pool_matrix(H, b))
        Pw = jnp.asarray(_adaptive_avg_pool_matrix(W, b))
        pooled = jnp.einsum("ih,nchw,jw->nijc", Ph, x_nchw, Pw)
        y = jnp.einsum("nijc,cr->nijr", pooled, p["w"])
        z = jax.nn.relu(y * p["scale"] + p["shift"])
        Ah = jnp.asarray(_bilinear_upsample_matrix(H, b))
        Aw = jnp.asarray(_bilinear_upsample_matrix(W, b))
        outs.append(jnp.einsum("hi,nijr,wj->nrhw", Ah, z, Aw))
    return jnp.concatenate(outs, axis=1)


def init_ppm_params(key, in_dim, reduction_dim, bins):
    """Deterministic synthetic params: 1x1 conv weight + BN (eval mode) as scale/shift."""
    eps = 1e-5
    params = []
    for i, _ in enumerate(bins):
        kw, kg, kb = jax.random.split(jax.random.fold_in(key, i), 3)
        w = 0.1 * jax.random.normal(kw, (in_dim, reduction_dim), jnp.float32)
        gamma = 1.0 + 0.1 * jax.random.normal(kg, (reduction_dim,), jnp.float32)
        beta = 0.1 * jax.random.normal(kb, (reduction_dim,), jnp.float32)
        running_mean = jnp.zeros((reduction_dim,), jnp.float32)
        running_var = jnp.ones((reduction_dim,), jnp.float32)
        scale = gamma / jnp.sqrt(running_var + eps)
        shift = beta - running_mean * scale
        params.append({"w": w, "scale": scale, "shift": shift})
    return params


if __name__ == "__main__":
    key = jax.random.PRNGKey(0)
    # Small but non-trivial: HW=576 pads to 640 -> 5 HW tiles of 128, exercising
    # the tiled reduction, the lane padding and the multi-tile upsample phase.
    N, C, H, W = 2, 8, 24, 24
    reduction_dim = 8
    bins = (1, 2, 3, 6)

    kx, kp = jax.random.split(key)
    x = jax.random.normal(kx, (N, C, H, W), jnp.float32)
    params = init_ppm_params(kp, C, reduction_dim, bins)

    out = jax.block_until_ready(ppm_forward(x, params, bins))
    ref = jax.block_until_ready(ppm_reference(x, params, bins))

    assert out.shape == (N, C + len(bins) * reduction_dim, H, W), out.shape
    # bf16 MXU operands with f32 accumulation -> loosened tolerance (review note).
    np.testing.assert_allclose(np.asarray(out), np.asarray(ref), rtol=2e-2, atol=2e-2)
    print("KERNEL_OK")
</pallas_src>

<mosaic_0001>
module attributes {stable_mosaic.version = 11 : i64} {
  func.func @kernel(%arg0: i32, %arg1: i32, %arg2: memref<1x8x128xbf16, #tpu.memory_space<vmem>>, %arg3: memref<128x128xbf16, #tpu.memory_space<vmem>>, %arg4: memref<4x8x8xbf16, #tpu.memory_space<vmem>>, %arg5: memref<4x8x1xf32, #tpu.memory_space<vmem>>, %arg6: memref<1x4x8x128xf32, #tpu.memory_space<vmem>>, %arg7: memref<8x128xf32, #tpu.memory_space<vmem>>) attributes {dimension_semantics = [#tpu.dimension_semantics<parallel>, #tpu.dimension_semantics<arbitrary>], iteration_bounds = array<i64: 2, 5>, scalar_prefetch = 0 : i64, scratch_operands = 1 : i64, tpu.core_type = #tpu.core_type<tc>, window_params = [{transform_indices = @transform_0, window_bounds = array<i64: 1, 8, 128>}, {transform_indices = @transform_1, window_bounds = array<i64: 128, 128>}, {pipeline_mode = #tpu.pipeline_mode<synchronous>, transform_indices = @transform_2, window_bounds = array<i64: 4, 8, 8>}, {pipeline_mode = #tpu.pipeline_mode<synchronous>, transform_indices = @transform_3, window_bounds = array<i64: 4, 8, 1>}, {transform_indices = @transform_4, window_bounds = array<i64: 1, 4, 8, 128>}]} {
    %c0_i32 = arith.constant 0 : i32
    %0 = arith.cmpi eq, %arg1, %c0_i32 : i32
    %1 = arith.extui %0 : i1 to i32
    %c0_i32_0 = arith.constant 0 : i32
    %2 = arith.cmpi ne, %1, %c0_i32_0 : i32
    scf.if %2 {
      %cst_10 = arith.constant 0.000000e+00 : f32
      %13 = vector.broadcast %cst_10 : f32 to vector<8x128xf32>
      %c0_11 = arith.constant 0 : index
      %c0_12 = arith.constant 0 : index
      %14 = vector.load %arg7[%c0_11, %c0_12] : memref<8x128xf32, #tpu.memory_space<vmem>>, vector<8x128xf32>
      tpu.vector_store %arg7[%c0_11, %c0_12], %13 {strides = array<i32>} : memref<8x128xf32, #tpu.memory_space<vmem>>, vector<8x128xf32>,
    } else {
    }
    %c0 = arith.constant 0 : index
    %c0_1 = arith.constant 0 : index
    %3 = vector.load %arg7[%c0, %c0_1] : memref<8x128xf32, #tpu.memory_space<vmem>>, vector<8x128xf32>
    %c0_2 = arith.constant 0 : index
    %c0_3 = arith.constant 0 : index
    %c0_4 = arith.constant 0 : index
    %4 = vector.load %arg2[%c0_2, %c0_3, %c0_4] : memref<1x8x128xbf16, #tpu.memory_space<vmem>>, vector<1x8x128xbf16>
    %5 = vector.shape_cast %4 : vector<1x8x128xbf16> to vector<8x128xbf16>
    %c0_5 = arith.constant 0 : index
    %c0_6 = arith.constant 0 : index
    %6 = vector.load %arg3[%c0_5, %c0_6] : memref<128x128xbf16, #tpu.memory_space<vmem>>, vector<128x128xbf16>
    %cst = arith.constant dense<0.000000e+00> : vector<8x128xf32>
    %7 = tpu.matmul %5, %6, %cst {dimension_numbers = #tpu.dot_dimension_numbers<[1], [0], [0], [1], [0, 0, 1, 1], [], []>} : vector<8x128xbf16>, vector<128x128xbf16>, vector<8x128xf32> -> vector<8x128xf32>
    %8 = arith.addf %3, %7 : vector<8x128xf32>
    %c0_7 = arith.constant 0 : index
    %c0_8 = arith.constant 0 : index
    %9 = vector.load %arg7[%c0_7, %c0_8] : memref<8x128xf32, #tpu.memory_space<vmem>>, vector<8x128xf32>
    tpu.vector_store %arg7[%c0_7, %c0_8], %8 {strides = array<i32>} : memref<8x128xf32, #tpu.memory_space<vmem>>, vector<8x128xf32>,
    %c4_i32 = arith.constant 4 : i32
    %10 = arith.cmpi eq, %arg1, %c4_i32 : i32
    %11 = arith.extui %10 : i1 to i32
    %c0_i32_9 = arith.constant 0 : i32
    %12 = arith.cmpi ne, %11, %c0_i32_9 : i32
    scf.if %12 {
      %c0_10 = arith.constant 0 : index
      %c0_11 = arith.constant 0 : index
      %13 = vector.load %arg7[%c0_10, %c0_11] : memref<8x128xf32, #tpu.memory_space<vmem>>, vector<8x128xf32>
      %14 = arith.truncf %13 : vector<8x128xf32> to vector<8x128xbf16>
      %c0_12 = arith.constant 0 : index
      %c0_13 = arith.constant 0 : index
      %c0_14 = arith.constant 0 : index
      %15 = vector.load %arg4[%c0_12, %c0_13, %c0_14] : memref<4x8x8xbf16, #tpu.memory_space<vmem>>, vector<1x8x8xbf16>
      %16 = vector.shape_cast %15 : vector<1x8x8xbf16> to vector<8x8xbf16>
      %cst_15 = arith.constant dense<0.000000e+00> : vector<8x128xf32>
      %17 = tpu.matmul %16, %14, %cst_15 {dimension_numbers = #tpu.dot_dimension_numbers<[1], [0], [0], [1], [0, 0, 1, 1], [], []>} : vector<8x8xbf16>, vector<8x128xbf16>, vector<8x128xf32> -> vector<8x128xf32>
      %c0_16 = arith.constant 0 : index
      %c0_17 = arith.constant 0 : index
      %c0_18 = arith.constant 0 : index
      %18 = vector.load %arg5[%c0_16, %c0_17, %c0_18] : memref<4x8x1xf32, #tpu.memory_space<vmem>>, vector<1x8x1xf32>
      %19 = vector.shape_cast %18 : vector<1x8x1xf32> to vector<8x1xf32>
      %20 = vector.broadcast %19 : vector<8x1xf32> to vector<8x128xf32>
      %21 = arith.addf %17, %20 : vector<8x128xf32>
      %cst_19 = arith.constant 0.000000e+00 : f32
      %22 = vector.broadcast %cst_19 : f32 to vector<8x128xf32>
      %23 = arith.maximumf %21, %22 : vector<8x128xf32>
      %24 = tpu.iota {dimensions = array<i32: 1>} : vector<8x128xi32>
      %c0_i32_20 = arith.constant 0 : i32
      %25 = vector.broadcast %c0_i32_20 : i32 to vector<8x128xi32>
      %26 = arith.cmpi sge, %24, %25 : vector<8x128xi32>
      %c1_i32 = arith.constant 1 : i32
      %27 = vector.broadcast %c1_i32 : i32 to vector<8x128xi32>
      %28 = arith.cmpi slt, %24, %27 : vector<8x128xi32>
      %29 = arith.andi %26, %28 : vector<8x128xi1>
      %cst_21 = arith.constant 0.000000e+00 : f32
      %30 = vector.broadcast %cst_21 : f32 to vector<8x128xf32>
      %31 = arith.select %29, %23, %30 : vector<8x128xi1>, vector<8x128xf32>
      %c0_22 = arith.constant 0 : index
      %c0_23 = arith.constant 0 : index
      %c0_24 = arith.constant 0 : index
      %c0_25 = arith.constant 0 : index
      %32 = vector.load %arg6[%c0_22, %c0_23, %c0_24, %c0_25] : memref<1x4x8x128xf32, #tpu.memory_space<vmem>>, vector<1x1x8x128xf32>
      %33 = vector.shape_cast %32 : vector<1x1x8x128xf32> to vector<8x128xf32>
      %34 = vector.shape_cast %31 : vector<8x128xf32> to vector<1x1x8x128xf32>
      tpu.vector_store %arg6[%c0_22, %c0_23, %c0_24, %c0_25], %34 {strides = array<i32>} : memref<1x4x8x128xf32, #tpu.memory_space<vmem>>, vector<1x1x8x128xf32>,
      %c1 = arith.constant 1 : index
      %c0_26 = arith.constant 0 : index
      %c0_27 = arith.constant 0 : index
      %35 = vector.load %arg4[%c1, %c0_26, %c0_27] : memref<4x8x8xbf16, #tpu.memory_space<vmem>>, vector<1x8x8xbf16>
      %36 = vector.shape_cast %35 : vector<1x8x8xbf16> to vector<8x8xbf16>
      %cst_28 = arith.constant dense<0.000000e+00> : vector<8x128xf32>
      %37 = tpu.matmul %36, %14, %cst_28 {dimension_numbers = #tpu.dot_dimension_numbers<[1], [0], [0], [1], [0, 0, 1, 1], [], []>} : vector<8x8xbf16>, vector<8x128xbf16>, vector<8x128xf32> -> vector<8x128xf32>
      %c1_29 = arith.constant 1 : index
      %c0_30 = arith.constant 0 : index
      %c0_31 = arith.constant 0 : index
      %38 = vector.load %arg5[%c1_29, %c0_30, %c0_31] : memref<4x8x1xf32, #tpu.memory_space<vmem>>, vector<1x8x1xf32>
      %39 = vector.shape_cast %38 : vector<1x8x1xf32> to vector<8x1xf32>
      %40 = vector.broadcast %39 : vector<8x1xf32> to vector<8x128xf32>
      %41 = arith.addf %37, %40 : vector<8x128xf32>
      %cst_32 = arith.constant 0.000000e+00 : f32
      %42 = vector.broadcast %cst_32 : f32 to vector<8x128xf32>
      %43 = arith.maximumf %41, %42 : vector<8x128xf32>
      %44 = tpu.iota {dimensions = array<i32: 1>} : vector<8x128xi32>
      %c1_i32_33 = arith.constant 1 : i32
      %45 = vector.broadcast %c1_i32_33 : i32 to vector<8x128xi32>
      %46 = arith.cmpi sge, %44, %45 : vector<8x128xi32>
      %c5_i32 = arith.constant 5 : i32
      %47 = vector.broadcast %c5_i32 : i32 to vector<8x128xi32>
      %48 = arith.cmpi slt, %44, %47 : vector<8x128xi32>
      %49 = arith.andi %46, %48 : vector<8x128xi1>
      %cst_34 = arith.constant 0.000000e+00 : f32
      %50 = vector.broadcast %cst_34 : f32 to vector<8x128xf32>
      %51 = arith.select %49, %43, %50 : vector<8x128xi1>, vector<8x128xf32>
      %c0_35 = arith.constant 0 : index
      %c1_36 = arith.constant 1 : index
      %c0_37 = arith.constant 0 : index
      %c0_38 = arith.constant 0 : index
      %52 = vector.load %arg6[%c0_35, %c1_36, %c0_37, %c0_38] : memref<1x4x8x128xf32, #tpu.memory_space<vmem>>, vector<1x1x8x128xf32>
      %53 = vector.shape_cast %52 : vector<1x1x8x128xf32> to vector<8x128xf32>
      %54 = vector.shape_cast %51 : vector<8x128xf32> to vector<1x1x8x128xf32>
      tpu.vector_store %arg6[%c0_35, %c1_36, %c0_37, %c0_38], %54 {strides = array<i32>} : memref<1x4x8x128xf32, #tpu.memory_space<vmem>>, vector<1x1x8x128xf32>,
      %c2 = arith.constant 2 : index
      %c0_39 = arith.constant 0 : index
      %c0_40 = arith.constant 0 : index
      %55 = vector.load %arg4[%c2, %c0_39, %c0_40] : memref<4x8x8xbf16, #tpu.memory_space<vmem>>, vector<1x8x8xbf16>
      %56 = vector.shape_cast %55 : vector<1x8x8xbf16> to vector<8x8xbf16>
      %cst_41 = arith.constant dense<0.000000e+00> : vector<8x128xf32>
      %57 = tpu.matmul %56, %14, %cst_41 {dimension_numbers = #tpu.dot_dimension_numbers<[1], [0], [0], [1], [0, 0, 1, 1], [], []>} : vector<8x8xbf16>, vector<8x128xbf16>, vector<8x128xf32> -> vector<8x128xf32>
      %c2_42 = arith.constant 2 : index
      %c0_43 = arith.constant 0 : index
      %c0_44 = arith.constant 0 : index
      %58 = vector.load %arg5[%c2_42, %c0_43, %c0_44] : memref<4x8x1xf32, #tpu.memory_space<vmem>>, vector<1x8x1xf32>
      %59 = vector.shape_cast %58 : vector<1x8x1xf32> to vector<8x1xf32>
      %60 = vector.broadcast %59 : vector<8x1xf32> to vector<8x128xf32>
      %61 = arith.addf %57, %60 : vector<8x128xf32>
      %cst_45 = arith.constant 0.000000e+00 : f32
      %62 = vector.broadcast %cst_45 : f32 to vector<8x128xf32>
      %63 = arith.maximumf %61, %62 : vector<8x128xf32>
      %64 = tpu.iota {dimensions = array<i32: 1>} : vector<8x128xi32>
      %c5_i32_46 = arith.constant 5 : i32
      %65 = vector.broadcast %c5_i32_46 : i32 to vector<8x128xi32>
      %66 = arith.cmpi sge, %64, %65 : vector<8x128xi32>
      %c14_i32 = arith.constant 14 : i32
      %67 = vector.broadcast %c14_i32 : i32 to vector<8x128xi32>
      %68 = arith.cmpi slt, %64, %67 : vector<8x128xi32>
      %69 = arith.andi %66, %68 : vector<8x128xi1>
      %cst_47 = arith.constant 0.000000e+00 : f32
      %70 = vector.broadcast %cst_47 : f32 to vector<8x128xf32>
      %71 = arith.select %69, %63, %70 : vector<8x128xi1>, vector<8x128xf32>
      %c0_48 = arith.constant 0 : index
      %c2_49 = arith.constant 2 : index
      %c0_50 = arith.constant 0 : index
      %c0_51 = arith.constant 0 : index
      %72 = vector.load %arg6[%c0_48, %c2_49, %c0_50, %c0_51] : memref<1x4x8x128xf32, #tpu.memory_space<vmem>>, vector<1x1x8x128xf32>
      %73 = vector.shape_cast %72 : vector<1x1x8x128xf32> to vector<8x128xf32>
      %74 = vector.shape_cast %71 : vector<8x128xf32> to vector<1x1x8x128xf32>
      tpu.vector_store %arg6[%c0_48, %c2_49, %c0_50, %c0_51], %74 {strides = array<i32>} : memref<1x4x8x128xf32, #tpu.memory_space<vmem>>, vector<1x1x8x128xf32>,
      %c3 = arith.constant 3 : index
      %c0_52 = arith.constant 0 : index
      %c0_53 = arith.constant 0 : index
      %75 = vector.load %arg4[%c3, %c0_52, %c0_53] : memref<4x8x8xbf16, #tpu.memory_space<vmem>>, vector<1x8x8xbf16>
      %76 = vector.shape_cast %75 : vector<1x8x8xbf16> to vector<8x8xbf16>
      %cst_54 = arith.constant dense<0.000000e+00> : vector<8x128xf32>
      %77 = tpu.matmul %76, %14, %cst_54 {dimension_numbers = #tpu.dot_dimension_numbers<[1], [0], [0], [1], [0, 0, 1, 1], [], []>} : vector<8x8xbf16>, vector<8x128xbf16>, vector<8x128xf32> -> vector<8x128xf32>
      %c3_55 = arith.constant 3 : index
      %c0_56 = arith.constant 0 : index
      %c0_57 = arith.constant 0 : index
      %78 = vector.load %arg5[%c3_55, %c0_56, %c0_57] : memref<4x8x1xf32, #tpu.memory_space<vmem>>, vector<1x8x1xf32>
      %79 = vector.shape_cast %78 : vector<1x8x1xf32> to vector<8x1xf32>
      %80 = vector.broadcast %79 : vector<8x1xf32> to vector<8x128xf32>
      %81 = arith.addf %77, %80 : vector<8x128xf32>
      %cst_58 = arith.constant 0.000000e+00 : f32
      %82 = vector.broadcast %cst_58 : f32 to vector<8x128xf32>
      %83 = arith.maximumf %81, %82 : vector<8x128xf32>
      %84 = tpu.iota {dimensions = array<i32: 1>} : vector<8x128xi32>
      %c14_i32_59 = arith.constant 14 : i32
      %85 = vector.broadcast %c14_i32_59 : i32 to vector<8x128xi32>
      %86 = arith.cmpi sge, %84, %85 : vector<8x128xi32>
      %c50_i32 = arith.constant 50 : i32
      %87 = vector.broadcast %c50_i32 : i32 to vector<8x128xi32>
      %88 = arith.cmpi slt, %84, %87 : vector<8x128xi32>
      %89 = arith.andi %86, %88 : vector<8x128xi1>
      %cst_60 = arith.constant 0.000000e+00 : f32
      %90 = vector.broadcast %cst_60 : f32 to vector<8x128xf32>
      %91 = arith.select %89, %83, %90 : vector<8x128xi1>, vector<8x128xf32>
      %c0_61 = arith.constant 0 : index
      %c3_62 = arith.constant 3 : index
      %c0_63 = arith.constant 0 : index
      %c0_64 = arith.constant 0 : index
      %92 = vector.load %arg6[%c0_61, %c3_62, %c0_63, %c0_64] : memref<1x4x8x128xf32, #tpu.memory_space<vmem>>, vector<1x1x8x128xf32>
      %93 = vector.shape_cast %92 : vector<1x1x8x128xf32> to vector<8x128xf32>
      %94 = vector.shape_cast %91 : vector<8x128xf32> to vector<1x1x8x128xf32>
      tpu.vector_store %arg6[%c0_61, %c3_62, %c0_63, %c0_64], %94 {strides = array<i32>} : memref<1x4x8x128xf32, #tpu.memory_space<vmem>>, vector<1x1x8x128xf32>,
    } else {
    }
    return
  }
  func.func @transform_0(%arg0: i32, %arg1: i32) -> (i32, i32, i32) {
    %c0_i32 = arith.constant 0 : i32
    %c0_i32_0 = arith.constant 0 : i32
    return %arg0, %c0_i32, %arg1 : i32, i32, i32
  }
  func.func @transform_1(%arg0: i32, %arg1: i32) -> (i32, i32) {
    %c0_i32 = arith.constant 0 : i32
    %c0_i32_0 = arith.constant 0 : i32
    return %arg1, %c0_i32 : i32, i32
  }
  func.func @transform_2(%arg0: i32, %arg1: i32) -> (i32, i32, i32) {
    %c0_i32 = arith.constant 0 : i32
    %c0_i32_0 = arith.constant 0 : i32
    %c0_i32_1 = arith.constant 0 : i32
    %c0_i32_2 = arith.constant 0 : i32
    return %c0_i32, %c0_i32_0, %c0_i32_1 : i32, i32, i32
  }
  func.func @transform_3(%arg0: i32, %arg1: i32) -> (i32, i32, i32) {
    %c0_i32 = arith.constant 0 : i32
    %c0_i32_0 = arith.constant 0 : i32
    %c0_i32_1 = arith.constant 0 : i32
    %c0_i32_2 = arith.constant 0 : i32
    return %c0_i32, %c0_i32_0, %c0_i32_1 : i32, i32, i32
  }
  func.func @transform_4(%arg0: i32, %arg1: i32) -> (i32, i32, i32, i32) {
    %c0_i32 = arith.constant 0 : i32
    %c0_i32_0 = arith.constant 0 : i32
    %c0_i32_1 = arith.constant 0 : i32
    %c0_i32_2 = arith.constant 0 : i32
    return %arg0, %c0_i32, %c0_i32_0, %c0_i32_1 : i32, i32, i32, i32
  }
}

</mosaic_0001>

<llo_original>
// kernel: tpu_custom_call.1
$region0: #{tpu_custom_call.1}
  #allocation0 [shape = 'u32[]', space=smem, size = 0x4, offset = 0x4, fixed_abs, tag = 'smem constant byte address 0x4 - core index']
  #allocation1 [shape = 'u32[144,128]{1,0:T(1,128)}', space=vmem, size = 0x12000, scoped, tag = 'internal scratch']
  #allocation2 [shape = 'f32[8,128]{1,0:T(8,128)}', space=vmem, size = 0x1000, scoped, tag = 'scratch operand']
  %s0 = inlined_call_operand.hbm [shape: bf16[2,8,640], index: 0, kind: input, shape index: {}]
  %s1 = inlined_call_operand.hbm [shape: bf16[640,128], index: 1, kind: input, shape index: {}]
  %s2 = inlined_call_operand.vmem [shape: bf16[4,8,8], index: 2, kind: input, shape index: {}]
  %s3 = inlined_call_operand.vmem [shape: f32[4,8,1], index: 3, kind: input, shape index: {}]
  %s4 = inlined_call_operand.hbm [shape: f32[2,4,8,128], index: 4, kind: output, shape index: {}]
  %s5 = sld [smem:[#allocation0]]
  $region65: #{tpu_custom_call.1} parent=0
    _
  %s7 = ssub.s32 1, %s5
  %s8 = scalar_select 0, %s7, %s5
  $region1: #{tpu_custom_call.1} parent=0
    #allocation3 [shape = 'u8[4096]{0}', space=vmem, size = 0x1000, scoped, tag = 'input window, operand 0']
    #allocation4 [shape = 's32[2]{0}', space=sflag, size = 0x8, scoped, tag = 'scoped memory for tpu_custom_call.1']
    #allocation5 [shape = 's32[2]{0}', space=sflag, size = 0x8, scoped, tag = 'scoped memory for tpu_custom_call.1']
    #allocation6 [shape = 'u8[65536]{0}', space=vmem, size = 0x10000, scoped, tag = 'input window, operand 1']
    #allocation7 [shape = 's32[2]{0}', space=sflag, size = 0x8, scoped, tag = 'scoped memory for tpu_custom_call.1']
    #allocation8 [shape = 'u8[32768]{0}', space=vmem, size = 0x8000, scoped, tag = 'output window, operand 0']
    %9 = vsyncpa [#allocation4], 0
    %s10 = scalar_lea.sflag [#allocation4], 1
    %11 = vsyncpa %s10, 0
    %12 = vsyncpa [#allocation7], 0
    %s13 = scalar_lea.sflag [#allocation7], 1
    %14 = vsyncpa %s13, 0
    %15 = vsyncpa [#allocation5], 0
    %s16 = scalar_lea.sflag [#allocation5], 1
    %17 = vsyncpa %s16, 0
    loop: start=0, step=1, limit=12
    $region2: #{tpu_custom_call.1} parent=1 // loop_pre_header
      _
    $region3: #{tpu_custom_call.1} parent=1 // loop_header
      %s19 = sphi 0, %s23
      %p20 = scmp.ge.s32.totalorder %s19, 12
      %s26 = sphi 0, %s38
      %s27 = sphi 0, %s34
      %s28 = sphi 0, %s26
      %s29 = sphi 0, %s27
      %s30 = sphi 0, %s28
      %s31 = sphi 0, %s29
      %s43 = sphi 0, %s45
      %s46 = sphi 0, %s43
      %s47 = sphi 0, %s46
      %s63 = sphi 0, %s47
      %s69 = sphi 0, %s71
      %s72 = sphi 0, %s69
      %s73 = sphi 0, %s72
      %s89 = sphi 0, %s73
      %s93 = sphi 0, %s93
      %s95 = sphi 0, %s93
      %s96 = sphi 0, %s95
      %s110 = sphi 0, %s96
      %s114 = sphi 0, %s114
      %s116 = sphi 0, %s114
      %s117 = sphi 0, %s116
      %s131 = sphi 0, %s117
      %s137 = sphi 0, %s139
      %s140 = sphi 0, %s137
      %s141 = sphi 0, %s140
      %s157 = sphi 0, %s141
    $region4: #{tpu_custom_call.1} parent=1 // loop_header_branch
      %22 = sbr.rel (%p20) target = $region8
    $region5: #{tpu_custom_call.1} parent=1 // loop_body
      %s24 = ssub.s32 %s19, 1
      %s25 = ssub.s32 %s19, 2
      %s32 = sadd.s32 1, %s27
      %p33 = scmp.ge.s32.totalorder %s32, 5
      %s34 = scalar_select %p33, 0, %s32
      %s35 = sadd.s32 1, %s26
      %s36 = scalar_select %p33, %s35, %s26
      %p37 = scmp.ge.s32.totalorder %s36, 2
      %s38 = scalar_select %p37, 0, %s36
      %s39 = ssub.s32 %s26, %s38
      %s40 = ssub.s32 %s27, %s34
      %s41 = sor.u32 %s39, %s40
      %p42 = scmp.eq.s32.totalorder %s41, 0
      %s44 = sadd.s32 %s43, 1
      %s45 = scalar_select %p42, %s43, %s44
      %p48 = pneg %p42
      %p49 = scmp.eq.s32.totalorder %s19, 9
      %p50 = por %p48, %p49
      %p51 = scmp.ne.s32.totalorder %s43, %s46
      %p52 = scmp.eq.s32.totalorder %s19, 0
      %p53 = por %p51, %p52
      %p54 = scmp.ne.s32.totalorder %s43, %s46
      %p55 = scmp.eq.s32.totalorder %s24, 9
      %p56 = por %p54, %p55
      %p57 = scmp.ne.s32.totalorder %s46, %s47
      %p58 = scmp.eq.s32.totalorder %s24, 0
      %p59 = por %p57, %p58
      %p60 = scmp.ne.s32.totalorder %s46, %s47
      %p61 = scmp.eq.s32.totalorder %s25, 9
      %p62 = por %p60, %p61
      %p64 = scmp.ne.s32.totalorder %s47, %s63
      %p65 = scmp.eq.s32.totalorder %s25, 0
      %p66 = por %p64, %p65
      %s67 = ssub.s32 %s27, %s34
      %p68 = scmp.eq.s32.totalorder %s67, 0
      %s70 = sadd.s32 %s69, 1
      %s71 = scalar_select %p68, %s69, %s70
      %p74 = pneg %p68
      %p75 = scmp.eq.s32.totalorder %s19, 9
      %p76 = por %p74, %p75
      %p77 = scmp.ne.s32.totalorder %s69, %s72
      %p78 = scmp.eq.s32.totalorder %s19, 0
      %p79 = por %p77, %p78
      %p80 = scmp.ne.s32.totalorder %s69, %s72
      %p81 = scmp.eq.s32.totalorder %s24, 9
      %p82 = por %p80, %p81
      %p83 = scmp.ne.s32.totalorder %s72, %s73
      %p84 = scmp.eq.s32.totalorder %s24, 0
      %p85 = por %p83, %p84
      %p86 = scmp.ne.s32.totalorder %s72, %s73
      %p87 = scmp.eq.s32.totalorder %s25, 9
      %p88 = por %p86, %p87
      %p90 = scmp.ne.s32.totalorder %s73, %s89
      %p91 = scmp.eq.s32.totalorder %s25, 0
      %p92 = por %p90, %p91
      %s94 = sadd.s32 %s93, 1
      %p97 = scmp.eq.s32.totalorder %s19, 9
      %p98 = scmp.ne.s32.totalorder %s93, %s95
      %p99 = scmp.eq.s32.totalorder %s19, 0
      %p100 = por %p98, %p99
      %p101 = scmp.ne.s32.totalorder %s93, %s95
      %p102 = scmp.eq.s32.totalorder %s24, 9
      %p103 = por %p101, %p102
      %p104 = scmp.ne.s32.totalorder %s95, %s96
      %p105 = scmp.eq.s32.totalorder %s24, 0
      %p106 = por %p104, %p105
      %p107 = scmp.ne.s32.totalorder %s95, %s96
      %p108 = scmp.eq.s32.totalorder %s25, 9
      %p109 = por %p107, %p108
      %p111 = scmp.ne.s32.totalorder %s96, %s110
      %p112 = scmp.eq.s32.totalorder %s25, 0
      %p113 = por %p111, %p112
      %s115 = sadd.s32 %s114, 1
      %p118 = scmp.eq.s32.totalorder %s19, 9
      %p119 = scmp.ne.s32.totalorder %s114, %s116
      %p120 = scmp.eq.s32.totalorder %s19, 0
      %p121 = por %p119, %p120
      %p122 = scmp.ne.s32.totalorder %s114, %s116
      %p123 = scmp.eq.s32.totalorder %s24, 9
      %p124 = por %p122, %p123
      %p125 = scmp.ne.s32.totalorder %s116, %s117
      %p126 = scmp.eq.s32.totalorder %s24, 0
      %p127 = por %p125, %p126
      %p128 = scmp.ne.s32.totalorder %s116, %s117
      %p129 = scmp.eq.s32.totalorder %s25, 9
      %p130 = por %p128, %p129
      %p132 = scmp.ne.s32.totalorder %s117, %s131
      %p133 = scmp.eq.s32.totalorder %s25, 0
      %p134 = por %p132, %p133
      %s135 = ssub.s32 %s26, %s38
      %p136 = scmp.eq.s32.totalorder %s135, 0
      %s138 = sadd.s32 %s137, 1
      %s139 = scalar_select %p136, %s137, %s138
      %p142 = pneg %p136
      %p143 = scmp.eq.s32.totalorder %s19, 9
      %p144 = por %p142, %p143
      %p145 = scmp.ne.s32.totalorder %s137, %s140
      %p146 = scmp.eq.s32.totalorder %s19, 0
      %p147 = por %p145, %p146
      %p148 = scmp.ne.s32.totalorder %s137, %s140
      %p149 = scmp.eq.s32.totalorder %s24, 9
      %p150 = por %p148, %p149
      %p151 = scmp.ne.s32.totalorder %s140, %s141
      %p152 = scmp.eq.s32.totalorder %s24, 0
      %p153 = por %p151, %p152
      %p154 = scmp.ne.s32.totalorder %s140, %s141
      %p155 = scmp.eq.s32.totalorder %s25, 9
      %p156 = por %p154, %p155
      %p158 = scmp.ne.s32.totalorder %s141, %s157
      %p159 = scmp.eq.s32.totalorder %s25, 0
      %p160 = por %p158, %p159
      %p161 = scmp.le.s32.totalorder 1, %s19
      %p162 = scmp.lt.s32.totalorder %s19, 11
      %p163 = pnand %p161, %p162
      %p164 = pneg %p163
      // Predicated region
      $region9: #{tpu_custom_call.1} parent=5 // pred_check
        _
      $region10: #{tpu_custom_call.1} parent=5 // pred_check_branch
        %166 = sbr.rel (%p163) target = $region12
      $region11: #{tpu_custom_call.1} parent=5 // pred_region
        %s167 = ssub.s32 %s19, 1
        // Predicated region
        $region13: #{tpu_custom_call.1} parent=11 // pred_check
          %p168 = pneg %p106
        $region14: #{tpu_custom_call.1} parent=11 // pred_check_branch
          %170 = sbr.rel (%p168) target = $region16
        $region15: #{tpu_custom_call.1} parent=11 // pred_region
          _
        $region16: #{tpu_custom_call.1} parent=11 // pred_fallthru
          _
        // Predicated region
        $region17: #{tpu_custom_call.1} parent=11 // pred_check
          %p171 = pneg %p127
        $region18: #{tpu_custom_call.1} parent=11 // pred_check_branch
          %173 = sbr.rel (%p171) target = $region20
        $region19: #{tpu_custom_call.1} parent=11 // pred_region
          _
        $region20: #{tpu_custom_call.1} parent=11 // pred_fallthru
          _
      $region12: #{tpu_custom_call.1} parent=5 // pred_fallthru
        _
      %p174 = scmp.lt.s32.totalorder %s19, 10
      // Predicated region
      $region21: #{tpu_custom_call.1} parent=5 // pred_check
        %p175 = pneg %p174
      $region22: #{tpu_custom_call.1} parent=5 // pred_check_branch
        %177 = sbr.rel (%p175) target = $region24
      $region23: #{tpu_custom_call.1} parent=5 // pred_region
        // Predicated region
        $region25: #{tpu_custom_call.1} parent=23 // pred_check
          %p178 = pneg %p53
        $region26: #{tpu_custom_call.1} parent=23 // pred_check_branch
          %180 = sbr.rel (%p178) target = $region28
        $region27: #{tpu_custom_call.1} parent=23 // pred_region
          %s181 = sand.u32 %s43, 1
          %s182 = scalar_lea.sflag [#allocation4], %s181
          %s183 = sand.u32 %s43, 1
          %s184 = smul.addr %s183, 4
          %s185 = scalar_lea.vmem [#allocation3], %s184
          %s187 = ssub.s32 64, 64
          %188 = vsyncadd %s182, %s187
          %s189 = smul.addr %s26, 5
          %s190 = sadd.s32 %s27, %s189
          %s191 = smul.addr %s190, 64
          %s192 = scalar_lea.hbm %s0, %s191
          %s194 = sshll.u32 %s185, 4
          %s195 = int_to_ptr.vmem [resolvable:$true] %s194
          %197 = dma.hbm_to_vmem [thread:$0]  %s192, 64, %s195, %s182
        $region28: #{tpu_custom_call.1} parent=23 // pred_fallthru
          _
        // Predicated region
        $region29: #{tpu_custom_call.1} parent=23 // pred_check
          %p198 = pneg %p79
        $region30: #{tpu_custom_call.1} parent=23 // pred_check_branch
          %200 = sbr.rel (%p198) target = $region32
        $region31: #{tpu_custom_call.1} parent=23 // pred_region
          %s201 = sand.u32 %s69, 1
          %s202 = scalar_lea.sflag [#allocation7], %s201
          %s203 = sand.u32 %s69, 1
          %s204 = smul.addr %s203, 64
          %s205 = scalar_lea.vmem [#allocation6], %s204
          %s206 = smul.u32 16, %s27
          %s208 = ssub.s32 1024, 1024
          %209 = vsyncadd %s202, %s208
          %s210 = smul.addr %s206, 64
          %s211 = scalar_lea.hbm %s1, %s210
          %s212 = sshll.u32 %s205, 4
          %s213 = int_to_ptr.vmem [resolvable:$true] %s212
          %218 = dma.hbm_to_vmem [thread:$0]  %s211, 1024, %s213, %s202, 64, 64, 4
        $region32: #{tpu_custom_call.1} parent=23 // pred_fallthru
          _
      $region24: #{tpu_custom_call.1} parent=5 // pred_fallthru
        _
      %p219 = scmp.le.s32.totalorder 1, %s19
      %p220 = scmp.lt.s32.totalorder %s19, 11
      %p221 = pnand %p219, %p220
      %p222 = pneg %p221
      // Predicated region
      $region33: #{tpu_custom_call.1} parent=5 // pred_check
        _
      $region34: #{tpu_custom_call.1} parent=5 // pred_check_branch
        %224 = sbr.rel (%p221) target = $region36
      $region35: #{tpu_custom_call.1} parent=5 // pred_region
        %s225 = ssub.s32 %s19, 1
        %s226 = sand.u32 %s46, 1
        %s227 = scalar_lea.sflag [#allocation4], %s226
        %s228 = sand.u32 %s46, 1
        %s229 = smul.addr %s228, 4
        %s230 = scalar_lea.vmem [#allocation3], %s229
        // Predicated region
        $region37: #{tpu_custom_call.1} parent=35 // pred_check
          %p231 = pneg %p59
        $region38: #{tpu_custom_call.1} parent=35 // pred_check_branch
          %233 = sbr.rel (%p231) target = $region40
        $region39: #{tpu_custom_call.1} parent=35 // pred_region
          %234 = dma.done %s227, 64
        $region40: #{tpu_custom_call.1} parent=35 // pred_fallthru
          _
        %s235 = sand.u32 %s72, 1
        %s236 = scalar_lea.sflag [#allocation7], %s235
        %s237 = sand.u32 %s72, 1
        %s238 = smul.addr %s237, 64
        %s239 = scalar_lea.vmem [#allocation6], %s238
        // Predicated region
        $region41: #{tpu_custom_call.1} parent=35 // pred_check
          %p240 = pneg %p85
        $region42: #{tpu_custom_call.1} parent=35 // pred_check_branch
          %242 = sbr.rel (%p240) target = $region44
        $region43: #{tpu_custom_call.1} parent=35 // pred_region
          %243 = dma.done %s236, 1024
        $region44: #{tpu_custom_call.1} parent=35 // pred_fallthru
          _
        %s244 = sand.u32 %s46, 1
        %s245 = scalar_lea.sflag [#allocation4], %s244
        %s246 = sand.u32 %s46, 1
        %s247 = smul.addr %s246, 4
        %s248 = scalar_lea.vmem [#allocation3], %s247
        %p249 = pneg %p59
        %p250 = pneg %p56
        %s251 = sand.u32 %s72, 1
        %s252 = scalar_lea.sflag [#allocation7], %s251
        %s253 = sand.u32 %s72, 1
        %s254 = smul.addr %s253, 64
        %s255 = scalar_lea.vmem [#allocation6], %s254
        %p256 = pneg %p85
        %p257 = pneg %p82
        %p258 = pneg %p106
        %p259 = pneg %p103
        %p260 = pneg %p127
        %p261 = pneg %p124
        %p262 = pneg %p153
        %p263 = pneg %p150
        %s264 = sand.u32 %s140, 1
        %s265 = scalar_lea.sflag [#allocation5], %s264
        %s266 = sand.u32 %s140, 1
        %s267 = smul.addr %s266, 32
        %s268 = scalar_lea.vmem [#allocation8], %s267
        %s269 = smul.u32 16, %s29
        %p271 = scmp.eq.s32.totalorder %s29, 0
        // Predicated region
        $region45: #{tpu_custom_call.1} parent=35 // pred_check
          %p272 = pneg %p271
        $region46: #{tpu_custom_call.1} parent=35 // pred_check_branch
          %274 = sbr.rel (%p272) target = $region48
        $region47: #{tpu_custom_call.1} parent=35 // pred_region
          %275 = vst [vmem:[#allocation2] sm:$0xff] 0.0
        $region48: #{tpu_custom_call.1} parent=35 // pred_fallthru
          _
        %v276 = vld [vmem:[#allocation2] sm:$0xff]
        %v277 = vld [vmem:[%s230] sm:$0xf]
        %v278 = vld [vmem:[%s239] sm:$0xf]
        %v279 = vld [vmem:[%s239 + $0x4] sm:$0xf]
        %v280 = vld [vmem:[%s239 + $0x8] sm:$0xf]
        %v281 = vld [vmem:[%s239 + $0xc] sm:$0xf]
        %v282 = vld [vmem:[%s239 + $0x10] sm:$0xf]
        %v283 = vld [vmem:[%s239 + $0x14] sm:$0xf]
        %v284 = vld [vmem:[%s239 + $0x18] sm:$0xf]
        %v285 = vld [vmem:[%s239 + $0x1c] sm:$0xf]
        %v286 = vld [vmem:[%s239 + $0x20] sm:$0xf]
        %v287 = vld [vmem:[%s239 + $0x24] sm:$0xf]
        %v288 = vld [vmem:[%s239 + $0x28] sm:$0xf]
        %v289 = vld [vmem:[%s239 + $0x2c] sm:$0xf]
        %v290 = vld [vmem:[%s239 + $0x30] sm:$0xf]
        %v291 = vld [vmem:[%s239 + $0x34] sm:$0xf]
        %v292 = vld [vmem:[%s239 + $0x38] sm:$0xf]
        %v293 = vld [vmem:[%s239 + $0x3c] sm:$0xf]
        %v310 = vunpack.c.l.b16 %v278
        %v311 = vunpack.c.l.b16 %v279
        %v312 = vunpack.c.l.b16 %v280
        %v313 = vunpack.c.l.b16 %v281
        %v314 = vunpack.c.l.b16 %v282
        %v315 = vunpack.c.l.b16 %v283
        %v316 = vunpack.c.l.b16 %v284
        %v317 = vunpack.c.l.b16 %v285
        %v318 = vunpack.c.l.b16 %v286
        %v319 = vunpack.c.l.b16 %v287
        %v320 = vunpack.c.l.b16 %v288
        %v321 = vunpack.c.l.b16 %v289
        %v322 = vunpack.c.l.b16 %v290
        %v323 = vunpack.c.l.b16 %v291
        %v324 = vunpack.c.l.b16 %v292
        %v325 = vunpack.c.l.b16 %v293
        %v326 = vpack.c.b16 %v311, %v310
        %v327 = vpack.c.b16 %v313, %v312
        %v328 = vpack.c.b16 %v315, %v314
        %v329 = vpack.c.b16 %v317, %v316
        %v330 = vpack.c.b16 %v319, %v318
        %v331 = vpack.c.b16 %v321, %v320
        %v332 = vpack.c.b16 %v323, %v322
        %v333 = vpack.c.b16 %v325, %v324
        %342 = vmatprep.subr.bf16.mxu0 0
        %343 = vmatpush1.bf16.msra.mxu0 %v333
        %344 = vmatprep.subr.bf16.mxu0 0
        %345 = vmatpush1.bf16.msra.mxu0 %v332
        %346 = vmatprep.subr.bf16.mxu0 0
        %347 = vmatpush1.bf16.msra.mxu0 %v331
        %348 = vmatprep.subr.bf16.mxu0 0
        %349 = vmatpush1.bf16.msra.mxu0 %v330
        %350 = vmatprep.subr.bf16.mxu0 0
        %351 = vmatpush1.bf16.msra.mxu0 %v329
        %352 = vmatprep.subr.bf16.mxu0 0
        %353 = vmatpush1.bf16.msra.mxu0 %v328
        %354 = vmatprep.subr.bf16.mxu0 0
        %355 = vmatpush1.bf16.msra.mxu0 %v327
        %356 = vmatprep.subr.bf16.mxu0 0
        %357 = vmatpush1.bf16.msra.mxu0 %v326
        %358 = vmatprep.subr.bf16.mxu0 0
        %359 = vmatpush2.bf16.msra.mxu0 0
        %360 = vmatprep.subr.bf16.mxu0 0
        %361 = vmatpush2.bf16.msra.mxu0 0
        %362 = vmatprep.subr.bf16.mxu0 0
        %363 = vmatpush2.bf16.msra.mxu0 0
        %364 = vmatprep.subr.bf16.mxu0 0
        %365 = vmatpush2.bf16.msra.mxu0 0
        %366 = vmatprep.subr.bf16.mxu0 0
        %367 = vmatpush2.bf16.msra.mxu0 0
        %368 = vmatprep.subr.bf16.mxu0 0
        %369 = vmatpush2.bf16.msra.mxu0 0
        %370 = vmatprep.subr.bf16.mxu0 0
        %371 = vmatpush2.bf16.msra.mxu0 0
        %372 = vmatprep.subr.bf16.mxu0 0
        %373 = vmatpush2.bf16.msra.mxu0 0
        %374 = vmatprep.mubr.bf16.mxu0 0
        %375 = vmatmul.mubr.bf16.gmra.mxu0 %v277
        %v376 = vpop.f32.mrf.mxu0
        %v377 = vadd.f32 0.0, %v376
        %v378 = vpop.f32.mrf.mxu0
        %v379 = vpop.f32.mrf.mxu0
        %v380 = vpop.f32.mrf.mxu0
        %381 = vdwg.mxu0
        %v382 = vadd.f32 %v276, %v377
        %383 = vst [vmem:[#allocation2] sm:$0xff] %v382
        %p384 = scmp.eq.s32.totalorder %s29, 4
        // Predicated region
        $region49: #{tpu_custom_call.1} parent=35 // pred_check
          %p385 = pneg %p384
        $region50: #{tpu_custom_call.1} parent=35 // pred_check_branch
          %387 = sbr.rel (%p385) target = $region52
        $region51: #{tpu_custom_call.1} parent=35 // pred_region
          %v388 = vld [vmem:[#allocation2] sm:$0xff]
          %v389 = vpack.c.bf16 %v388, %v388
          %v390 = vld [vmem:[%s2] sm:$0xf]
          %v391 = vld [vmem:[%s3] sm:$0xff]
          %393 = vset.pattern.permute.xlu0 0
          %394 = vperm.xlu0 %393, %v391
          %v395 = vpop.permute.xlu0 %394
          %vm397 = vcmask 64512
          %v399 = vsel %vm397, %v390, 0
          %vm401 = vcmask 1043456
          %v403 = vsel %vm401, %v389, 0
          %405 = vmatprep.subr.bf16.mxu0 0
          %406 = vmatpush1.bf16.msra.mxu0 0
          %407 = vmatprep.subr.bf16.mxu0 0
          %408 = vmatpush1.bf16.msra.mxu0 0
          %409 = vmatprep.subr.bf16.mxu0 0
          %410 = vmatpush1.bf16.msra.mxu0 0
          %411 = vmatprep.subr.bf16.mxu0 0
          %412 = vmatpush1.bf16.msra.mxu0 0
          %413 = vmatprep.subr.bf16.mxu0 0
          %414 = vmatpush1.bf16.msra.mxu0 0
          %415 = vmatprep.subr.bf16.mxu0 0
          %416 = vmatpush1.bf16.msra.mxu0 0
          %417 = vmatprep.subr.bf16.mxu0 0
          %418 = vmatpush1.bf16.msra.mxu0 0
          %419 = vmatprep.subr.bf16.mxu0 0
          %420 = vmatpush1.bf16.msra.mxu0 %v403
          %421 = vmatprep.subr.bf16.mxu0 0
          %422 = vmatpush2.bf16.msra.mxu0 0
          %423 = vmatprep.subr.bf16.mxu0 0
          %424 = vmatpush2.bf16.msra.mxu0 0
          %425 = vmatprep.subr.bf16.mxu0 0
          %426 = vmatpush2.bf16.msra.mxu0 0
          %427 = vmatprep.subr.bf16.mxu0 0
          %428 = vmatpush2.bf16.msra.mxu0 0
          %429 = vmatprep.subr.bf16.mxu0 0
          %430 = vmatpush2.bf16.msra.mxu0 0
          %431 = vmatprep.subr.bf16.mxu0 0
          %432 = vmatpush2.bf16.msra.mxu0 0
          %433 = vmatprep.subr.bf16.mxu0 0
          %434 = vmatpush2.bf16.msra.mxu0 0
          %435 = vmatprep.subr.bf16.mxu0 0
          %436 = vmatpush2.bf16.msra.mxu0 0
          %437 = vmatprep.mubr.bf16.mxu0 0
          %438 = vmatmul.mubr.bf16.gmra.mxu0 %v399
          %v439 = vpop.f32.mrf.mxu0
          %v440 = vadd.f32 %v395, %v439
          %v441 = vpop.f32.mrf.mxu0
          %v442 = vpop.f32.mrf.mxu0
          %v443 = vpop.f32.mrf.mxu0
          %444 = vdwg.mxu0
          %v445 = vmax.f32 %v440, 0.0
          %v446 = vlaneseq
          %v447 = vand.u32 %v446, 127
          %vm448 = vcmp.ge.s32.totalorder %v447, 0
          %vm449 = vcmp.lt.s32.totalorder %v447, 1
          %vm450 = vmand %vm448, %vm449
          %v451 = vsel %vm450, %v445, 0.0
          %452 = vst [vmem:[%s268] sm:$0xff] %v451
          %s453 = scalar_lea.vmem %s2, 4
          %v454 = vld [vmem:[%s453] sm:$0xf]
          %s455 = scalar_lea.vmem %s3, 8
          %v456 = vld [vmem:[%s455] sm:$0xff]
          %458 = vset.pattern.permute.xlu0 0
          %459 = vperm.xlu0 %458, %v456
          %v460 = vpop.permute.xlu0 %459
          %v463 = vsel %vm397, %v454, 0
          %465 = vmatprep.subr.bf16.mxu0 0
          %466 = vmatpush1.bf16.msra.mxu0 0
          %467 = vmatprep.subr.bf16.mxu0 0
          %468 = vmatpush1.bf16.msra.mxu0 0
          %469 = vmatprep.subr.bf16.mxu0 0
          %470 = vmatpush1.bf16.msra.mxu0 0
          %471 = vmatprep.subr.bf16.mxu0 0
          %472 = vmatpush1.bf16.msra.mxu0 0
          %473 = vmatprep.subr.bf16.mxu0 0
          %474 = vmatpush1.bf16.msra.mxu0 0
          %475 = vmatprep.subr.bf16.mxu0 0
          %476 = vmatpush1.bf16.msra.mxu0 0
          %477 = vmatprep.subr.bf16.mxu0 0
          %478 = vmatpush1.bf16.msra.mxu0 0
          %479 = vmatprep.subr.bf16.mxu0 0
          %480 = vmatpush1.bf16.msra.mxu0 %v403
          %481 = vmatprep.subr.bf16.mxu0 0
          %482 = vmatpush2.bf16.msra.mxu0 0
          %483 = vmatprep.subr.bf16.mxu0 0
          %484 = vmatpush2.bf16.msra.mxu0 0
          %485 = vmatprep.subr.bf16.mxu0 0
          %486 = vmatpush2.bf16.msra.mxu0 0
          %487 = vmatprep.subr.bf16.mxu0 0
          %488 = vmatpush2.bf16.msra.mxu0 0
          %489 = vmatprep.subr.bf16.mxu0 0
          %490 = vmatpush2.bf16.msra.mxu0 0
          %491 = vmatprep.subr.bf16.mxu0 0
          %492 = vmatpush2.bf16.msra.mxu0 0
          %493 = vmatprep.subr.bf16.mxu0 0
          %494 = vmatpush2.bf16.msra.mxu0 0
          %495 = vmatprep.subr.bf16.mxu0 0
          %496 = vmatpush2.bf16.msra.mxu0 0
          %497 = vmatprep.mubr.bf16.mxu0 0
          %498 = vmatmul.mubr.bf16.gmra.mxu0 %v463
          %v499 = vpop.f32.mrf.mxu0
          %v500 = vadd.f32 %v460, %v499
          %v501 = vpop.f32.mrf.mxu0
          %v502 = vpop.f32.mrf.mxu0
          %v503 = vpop.f32.mrf.mxu0
          %504 = vdwg.mxu0
          %v505 = vmax.f32 %v500, 0.0
          %vm506 = vcmp.ge.s32.totalorder %v447, 1
          %vm507 = vcmp.lt.s32.totalorder %v447, 5
          %vm508 = vmand %vm506, %vm507
          %v509 = vsel %vm508, %v505, 0.0
          %s510 = scalar_lea.vmem %s268, 8 [#allocation8]
          %511 = vst [vmem:[%s510] sm:$0xff] %v509
          %s512 = scalar_lea.vmem %s2, 8
          %v513 = vld [vmem:[%s512] sm:$0xf]
          %s514 = scalar_lea.vmem %s3, 16
          %v515 = vld [vmem:[%s514] sm:$0xff]
          %517 = vset.pattern.permute.xlu0 0
          %518 = vperm.xlu0 %517, %v515
          %v519 = vpop.permute.xlu0 %518
          %v522 = vsel %vm397, %v513, 0
          %524 = vmatprep.subr.bf16.mxu0 0
          %525 = vmatpush1.bf16.msra.mxu0 0
          %526 = vmatprep.subr.bf16.mxu0 0
          %527 = vmatpush1.bf16.msra.mxu0 0
          %528 = vmatprep.subr.bf16.mxu0 0
          %529 = vmatpush1.bf16.msra.mxu0 0
          %530 = vmatprep.subr.bf16.mxu0 0
          %531 = vmatpush1.bf16.msra.mxu0 0
          %532 = vmatprep.subr.bf16.mxu0 0
          %533 = vmatpush1.bf16.msra.mxu0 0
          %534 = vmatprep.subr.bf16.mxu0 0
          %535 = vmatpush1.bf16.msra.mxu0 0
          %536 = vmatprep.subr.bf16.mxu0 0
          %537 = vmatpush1.bf16.msra.mxu0 0
          %538 = vmatprep.subr.bf16.mxu0 0
          %539 = vmatpush1.bf16.msra.mxu0 %v403
          %540 = vmatprep.subr.bf16.mxu0 0
          %541 = vmatpush2.bf16.msra.mxu0 0
          %542 = vmatprep.subr.bf16.mxu0 0
          %543 = vmatpush2.bf16.msra.mxu0 0
          %544 = vmatprep.subr.bf16.mxu0 0
          %545 = vmatpush2.bf16.msra.mxu0 0
          %546 = vmatprep.subr.bf16.mxu0 0
          %547 = vmatpush2.bf16.msra.mxu0 0
          %548 = vmatprep.subr.bf16.mxu0 0
          %549 = vmatpush2.bf16.msra.mxu0 0
          %550 = vmatprep.subr.bf16.mxu0 0
          %551 = vmatpush2.bf16.msra.mxu0 0
          %552 = vmatprep.subr.bf16.mxu0 0
          %553 = vmatpush2.bf16.msra.mxu0 0
          %554 = vmatprep.subr.bf16.mxu0 0
          %555 = vmatpush2.bf16.msra.mxu0 0
          %556 = vmatprep.mubr.bf16.mxu0 0
          %557 = vmatmul.mubr.bf16.gmra.mxu0 %v522
          %v558 = vpop.f32.mrf.mxu0
          %v559 = vadd.f32 %v519, %v558
          %v560 = vpop.f32.mrf.mxu0
          %v561 = vpop.f32.mrf.mxu0
          %v562 = vpop.f32.mrf.mxu0
          %563 = vdwg.mxu0
          %v564 = vmax.f32 %v559, 0.0
          %vm565 = vcmp.ge.s32.totalorder %v447, 5
          %vm566 = vcmp.lt.s32.totalorder %v447, 14
          %vm567 = vmand %vm565, %vm566
          %v568 = vsel %vm567, %v564, 0.0
          %s569 = scalar_lea.vmem %s268, 16 [#allocation8]
          %570 = vst [vmem:[%s569] sm:$0xff] %v568
          %s571 = scalar_lea.vmem %s2, 12
          %v572 = vld [vmem:[%s571] sm:$0xf]
          %s573 = scalar_lea.vmem %s3, 24
          %v574 = vld [vmem:[%s573] sm:$0xff]
          %576 = vset.pattern.permute.xlu0 0
          %577 = vperm.xlu0 %576, %v574
          %v578 = vpop.permute.xlu0 %577
          %v581 = vsel %vm397, %v572, 0
          %583 = vmatprep.subr.bf16.mxu0 0
          %584 = vmatpush1.bf16.msra.mxu0 0
          %585 = vmatprep.subr.bf16.mxu0 0
          %586 = vmatpush1.bf16.msra.mxu0 0
          %587 = vmatprep.subr.bf16.mxu0 0
          %588 = vmatpush1.bf16.msra.mxu0 0
          %589 = vmatprep.subr.bf16.mxu0 0
          %590 = vmatpush1.bf16.msra.mxu0 0
          %591 = vmatprep.subr.bf16.mxu0 0
          %592 = vmatpush1.bf16.msra.mxu0 0
          %593 = vmatprep.subr.bf16.mxu0 0
          %594 = vmatpush1.bf16.msra.mxu0 0
          %595 = vmatprep.subr.bf16.mxu0 0
          %596 = vmatpush1.bf16.msra.mxu0 0
          %597 = vmatprep.subr.bf16.mxu0 0
          %598 = vmatpush1.bf16.msra.mxu0 %v403
          %599 = vmatprep.subr.bf16.mxu0 0
          %600 = vmatpush2.bf16.msra.mxu0 0
          %601 = vmatprep.subr.bf16.mxu0 0
          %602 = vmatpush2.bf16.msra.mxu0 0
          %603 = vmatprep.subr.bf16.mxu0 0
          %604 = vmatpush2.bf16.msra.mxu0 0
          %605 = vmatprep.subr.bf16.mxu0 0
          %606 = vmatpush2.bf16.msra.mxu0 0
          %607 = vmatprep.subr.bf16.mxu0 0
          %608 = vmatpush2.bf16.msra.mxu0 0
          %609 = vmatprep.subr.bf16.mxu0 0
          %610 = vmatpush2.bf16.msra.mxu0 0
          %611 = vmatprep.subr.bf16.mxu0 0
          %612 = vmatpush2.bf16.msra.mxu0 0
          %613 = vmatprep.subr.bf16.mxu0 0
          %614 = vmatpush2.bf16.msra.mxu0 0
          %615 = vmatprep.mubr.bf16.mxu0 0
          %616 = vmatmul.mubr.bf16.gmra.mxu0 %v581
          %v617 = vpop.f32.mrf.mxu0
          %v618 = vadd.f32 %v578, %v617
          %v619 = vpop.f32.mrf.mxu0
          %v620 = vpop.f32.mrf.mxu0
          %v621 = vpop.f32.mrf.mxu0
          %622 = vdwg.mxu0
          %v623 = vmax.f32 %v618, 0.0
          %vm624 = vcmp.ge.s32.totalorder %v447, 14
          %vm625 = vcmp.lt.s32.totalorder %v447, 50
          %vm626 = vmand %vm624, %vm625
          %v627 = vsel %vm626, %v623, 0.0
          %s628 = scalar_lea.vmem %s268, 24 [#allocation8]
          %629 = vst [vmem:[%s628] sm:$0xff] %v627
        $region52: #{tpu_custom_call.1} parent=35 // pred_fallthru
          _
        %s630 = sand.u32 %s140, 1
        %s631 = scalar_lea.sflag [#allocation5], %s630
        %s632 = sand.u32 %s140, 1
        %s633 = smul.addr %s632, 32
        %s634 = scalar_lea.vmem [#allocation8], %s633
        // Predicated region
        $region53: #{tpu_custom_call.1} parent=35 // pred_check
          %p635 = pneg %p150
        $region54: #{tpu_custom_call.1} parent=35 // pred_check_branch
          %637 = sbr.rel (%p635) target = $region56
        $region55: #{tpu_custom_call.1} parent=35 // pred_region
          %s639 = ssub.s32 512, 512
          %640 = vsyncadd %s631, %s639
          %s641 = smul.addr %s28, 4
          %s642 = smul.addr %s641, 128
          %s643 = scalar_lea.hbm %s4, %s642
          %s644 = sshll.u32 %s634, 4
          %s645 = int_to_ptr.vmem [resolvable:$true] %s644
          %650 = dma.vmem_to_hbm [thread:$0]  %s645, 512, %s643, %s631, 128, 128, 8
        $region56: #{tpu_custom_call.1} parent=35 // pred_fallthru
          _
      $region36: #{tpu_custom_call.1} parent=5 // pred_fallthru
        _
      %p651 = scmp.le.s32.totalorder 2, %s19
      // Predicated region
      $region57: #{tpu_custom_call.1} parent=5 // pred_check
        %p652 = pneg %p651
      $region58: #{tpu_custom_call.1} parent=5 // pred_check_branch
        %654 = sbr.rel (%p652) target = $region60
      $region59: #{tpu_custom_call.1} parent=5 // pred_region
        %s655 = ssub.s32 %s19, 2
        // Predicated region
        $region61: #{tpu_custom_call.1} parent=59 // pred_check
          %p656 = pneg %p156
        $region62: #{tpu_custom_call.1} parent=59 // pred_check_branch
          %658 = sbr.rel (%p656) target = $region64
        $region63: #{tpu_custom_call.1} parent=59 // pred_region
          %s659 = sand.u32 %s141, 1
          %s660 = scalar_lea.sflag [#allocation5], %s659
          %s661 = sand.u32 %s141, 1
          %s662 = smul.addr %s661, 32
          %s663 = scalar_lea.vmem [#allocation8], %s662
          %664 = dma.done %s660, 512
        $region64: #{tpu_custom_call.1} parent=59 // pred_fallthru
          _
      $region60: #{tpu_custom_call.1} parent=5 // pred_fallthru
        _
    $region6: #{tpu_custom_call.1} parent=1 // loop_footer
      %s23 = sadd.s32 1, %s19
    $region7: #{tpu_custom_call.1} parent=1 // loop_footer_branch
      %18 = sbr.rel target = $region3
    $region8: #{tpu_custom_call.1} parent=1 // loop_exit
      _
    %665 = vsyncpa [#allocation4], 1
    %s666 = scalar_lea.sflag [#allocation4], 1
    %667 = vsyncpa %s666, 1
    %668 = vsyncpa [#allocation7], 1
    %s669 = scalar_lea.sflag [#allocation7], 1
    %670 = vsyncpa %s669, 1
    %671 = vsyncpa [#allocation5], 1
    %s672 = scalar_lea.sflag [#allocation5], 1
    %673 = vsyncpa %s672, 1

</llo_original>
